<compile_context>
chip_gen: v5e
topology: v5e:2x2
jax: 0.10.0
libtpu: 0.0.40
codegen_flags: <defaults>
</compile_context>

<pallas_src>
import jax
import jax.numpy as jnp
from jax.experimental import pallas as pl
from jax.experimental.pallas import tpu as pltpu


# ----------------------------- glue: camera math -----------------------------
def _normalize(v, eps=1e-5):
    n = jnp.sqrt(jnp.sum(v * v, axis=-1, keepdims=True))
    return v / jnp.maximum(n, eps)


def look_at_rotation(camera_position, at, up):
    # pytorch3d.renderer.cameras.look_at_rotation (batch of 1), pure JAX.
    z_axis = _normalize(at - camera_position)
    x_axis = _normalize(jnp.cross(up, z_axis))
    y_axis = _normalize(jnp.cross(z_axis, x_axis))
    is_close = jnp.all(jnp.isclose(x_axis, 0.0, atol=5e-3), axis=1, keepdims=True)
    replacement = _normalize(jnp.cross(y_axis, z_axis))
    x_axis = jnp.where(is_close, replacement, x_axis)
    R = jnp.concatenate(
        [x_axis[:, None, :], y_axis[:, None, :], z_axis[:, None, :]], axis=1
    )
    return jnp.transpose(R, (0, 2, 1))  # (1, 3, 3)


# ------------------------------- Pallas kernel --------------------------------
def fit_kernel(b_ref, a_ref, o_ref):
    # b_ref: (3, C)   fused weights  [s*R | s*W | T | 0] transposed
    # a_ref: (C, tm)  fused inputs   [mu3 | E_flat | 1 | 0] transposed (lane-dense)
    # o_ref: (3, tm)  transposed output tile (lane-dense stores)
    o_ref[...] = jnp.dot(b_ref[...], a_ref[...], preferred_element_type=jnp.float32)


def fit_model_forward(params, buffers, tm=None):
    ear_mu = buffers["ear_mu"]            # (3N, 1)
    E = buffers["ear_eigenvectors"]       # (3N, K)
    V = buffers["ear_eigenvalues"]        # (1, K)
    shape_vec = buffers["shape_vec"]      # (1, K)
    cam_pos = params["cam_pos"]           # (3,)
    look_at = params["look_at"]           # (3,)
    up = params["up"]                     # (3,)
    scale = params["scale_factor"]        # ()

    M, K = E.shape
    N = M // 3

    # --- tiny 3x3 camera math (glue JAX) ---
    R = look_at_rotation(cam_pos[None, :], look_at[None, :], up[None, :])        # (1,3,3)
    T = -jnp.matmul(jnp.transpose(R, (0, 2, 1)), cam_pos[None, :, None])[:, :, 0]  # (1,3)
    R0 = R[0]                                                                     # (3,3)
    T0 = T                                                                        # (1,3)

    # --- host-side folding (glue) ---
    s = jnp.maximum(0.0, scale)                    # ReLU'd scale, folded into weights
    c = (shape_vec * V)[0]                         # (K,)
    mu3 = ear_mu.reshape(N, 3)                     # (N, 3)
    E_flat = E.reshape(N, 3 * K)                   # (N, 3K); (d,k) -> d*K + k
    W = (c[None, :, None] * R0[:, None, :]).reshape(3 * K, 3)  # coeffs folded with R

    # Fused contraction: [mu3 | E_flat | ones] vs [s*R ; s*W ; T], zero-padded to 128*m.
    Cr = 3 + 3 * K + 1
    C = pl.cdiv(Cr, 128) * 128

    ones = jnp.ones((N, 1), jnp.float32)
    A = jnp.concatenate([mu3, E_flat, ones], axis=1)               # (N, Cr)
    B = jnp.concatenate([s * R0, s * W, T0], axis=0)               # (Cr, 3)

    # Tile sizing: single block at small N, 8192-row tiles (multiple of 128) at
    # large N (128*tm*4B*2 buffers stays far under the 32 MiB scoped VMEM default,
    # safe on v7x's 64 MiB physical VMEM too).
    N128 = pl.cdiv(N, 128) * 128
    if tm is None:
        tm = min(N128, 8192)
    else:
        tm = pl.cdiv(tm, 128) * 128
    Np = pl.cdiv(N128, tm) * tm

    # Lane-dense transposed operands. Padded vertex columns are all-zero
    # (including the "ones" row), so their outputs are 0 and get sliced off.
    A_T = jnp.pad(A, ((0, Np - N), (0, C - Cr))).T                 # (C, Np)
    B_T = jnp.pad(B, ((0, C - Cr), (0, 0))).T                      # (3, C)
    # NOTE: for very large meshes, cast A_T to bfloat16 here (HBM-bound stream);
    # the dot keeps f32 accumulation.

    out_t = pl.pallas_call(
        fit_kernel,
        out_shape=jax.ShapeDtypeStruct((3, Np), jnp.float32),
        grid_spec=pltpu.PrefetchScalarGridSpec(
            num_scalar_prefetch=0,
            grid=(Np // tm,),
            in_specs=[
                pl.BlockSpec((3, C), lambda i: (0, 0)),    # fused weights (full)
                pl.BlockSpec((C, tm), lambda i: (0, i)),   # fused input tile
            ],
            out_specs=pl.BlockSpec((3, tm), lambda i: (0, i)),
        ),
        compiler_params=pltpu.CompilerParams(dimension_semantics=("parallel",)),
    )(B_T, A_T)

    verts = out_t.T[:N]                                            # (N, 3)
    return verts, R0, T0[0]


# ------------------------------ pure-JAX reference -----------------------------
def reference(params, buffers):
    ear_mu = buffers["ear_mu"]
    E = buffers["ear_eigenvectors"]
    V = buffers["ear_eigenvalues"]
    shape_vec = buffers["shape_vec"]
    verts = ear_mu + E @ (shape_vec * V).T
    verts = verts.reshape(-1, 3)
    verts = jnp.maximum(0.0, params["scale_factor"]) * verts
    R = look_at_rotation(params["cam_pos"][None, :], params["look_at"][None, :],
                         params["up"][None, :])
    T = -jnp.matmul(jnp.transpose(R, (0, 2, 1)),
                    params["cam_pos"][None, :, None])[:, :, 0]
    R0, T0 = R[0], T[0]
    verts = verts @ R0 + T0
    return verts, R0, T0


if __name__ == "__main__":
    key = jax.random.PRNGKey(0)
    N, K = 256, 32  # number of ear-mesh vertices, number of PCA eigenvectors
    k1, k2, k3, k4 = jax.random.split(key, 4)

    # deterministic synthetic buffers (shapes implied by FitModel.__init__/forward)
    buffers = {
        "ear_mu": jax.random.normal(k1, (3 * N, 1), dtype=jnp.float32),
        "ear_eigenvectors": 0.1 * jax.random.normal(k2, (3 * N, K), dtype=jnp.float32),
        "ear_eigenvalues": jax.random.uniform(k3, (1, K), jnp.float32, 0.1, 1.0),
        "shape_vec": jax.random.normal(k4, (1, K), dtype=jnp.float32),  # shape_vec_value = given
    }
    # parameters initialized exactly as in __init__
    params = {
        "cam_pos": jnp.array([0.0, 0.0, 0.0], jnp.float32),
        "look_at": jnp.array([0.0, 0.0, 1.0], jnp.float32),
        "up": jnp.array([0.0, 1.0, 0.0], jnp.float32),
        "scale_factor": jnp.array(120.0, jnp.float32),
    }

    verts, R, T = fit_model_forward(params, buffers)
    jax.block_until_ready(verts)

    v_ref, R_ref, T_ref = reference(params, buffers)
    assert verts.shape == (N, 3) and R.shape == (3, 3) and T.shape == (3,)
    assert jnp.allclose(verts, v_ref, atol=1e-2, rtol=1e-4), "verts mismatch"
    assert jnp.allclose(R, R_ref, atol=1e-5), "R mismatch"
    assert jnp.allclose(T, T_ref, atol=1e-5), "T mismatch"
    print("KERNEL_OK")
</pallas_src>

<mosaic_0001>
module attributes {stable_mosaic.version = 11 : i64} {
  func.func @fit_kernel(%arg0: i32, %arg1: memref<3x128xf32, #tpu.memory_space<vmem>>, %arg2: memref<128x256xf32, #tpu.memory_space<vmem>>, %arg3: memref<3x256xf32, #tpu.memory_space<vmem>>) attributes {dimension_semantics = [#tpu.dimension_semantics<parallel>], iteration_bounds = array<i64: 1>, scalar_prefetch = 0 : i64, scratch_operands = 0 : i64, tpu.core_type = #tpu.core_type<tc>, window_params = [{pipeline_mode = #tpu.pipeline_mode<synchronous>, transform_indices = @transform_0, window_bounds = array<i64: 3, 128>}, {transform_indices = @transform_1, window_bounds = array<i64: 128, 256>}, {transform_indices = @transform_2, window_bounds = array<i64: 3, 256>}]} {
    %c0 = arith.constant 0 : index
    %c0_0 = arith.constant 0 : index
    %0 = vector.load %arg1[%c0, %c0_0] : memref<3x128xf32, #tpu.memory_space<vmem>>, vector<3x128xf32>
    %c0_1 = arith.constant 0 : index
    %c0_2 = arith.constant 0 : index
    %1 = vector.load %arg2[%c0_1, %c0_2] : memref<128x256xf32, #tpu.memory_space<vmem>>, vector<128x256xf32>
    %cst = arith.constant dense<0.000000e+00> : vector<3x256xf32>
    %2 = tpu.matmul %0, %1, %cst {dimension_numbers = #tpu.dot_dimension_numbers<[1], [0], [0], [1], [0, 0, 1, 1], [], []>} : vector<3x128xf32>, vector<128x256xf32>, vector<3x256xf32> -> vector<3x256xf32>
    %c0_3 = arith.constant 0 : index
    %c0_4 = arith.constant 0 : index
    %3 = vector.load %arg3[%c0_3, %c0_4] : memref<3x256xf32, #tpu.memory_space<vmem>>, vector<3x256xf32>
    tpu.vector_store %arg3[%c0_3, %c0_4], %2 {strides = array<i32>} : memref<3x256xf32, #tpu.memory_space<vmem>>, vector<3x256xf32>,
    return
  }
  func.func @transform_0(%arg0: i32) -> (i32, i32) {
    %c0_i32 = arith.constant 0 : i32
    %c0_i32_0 = arith.constant 0 : i32
    %c0_i32_1 = arith.constant 0 : i32
    return %c0_i32, %c0_i32_0 : i32, i32
  }
  func.func @transform_1(%arg0: i32) -> (i32, i32) {
    %c0_i32 = arith.constant 0 : i32
    %c0_i32_0 = arith.constant 0 : i32
    return %c0_i32, %arg0 : i32, i32
  }
  func.func @transform_2(%arg0: i32) -> (i32, i32) {
    %c0_i32 = arith.constant 0 : i32
    %c0_i32_0 = arith.constant 0 : i32
    return %c0_i32, %arg0 : i32, i32
  }
}

</mosaic_0001>

<llo_original>
// kernel: tpu_custom_call.1
$region0: #{tpu_custom_call.1}
  #allocation0 [shape = 'u32[]', space=smem, size = 0x4, offset = 0x4, fixed_abs, tag = 'smem constant byte address 0x4 - core index']
  #allocation1 [shape = 'u32[72,128]{1,0:T(1,128)}', space=vmem, size = 0x9000, scoped, tag = 'internal scratch']
  %s0 = inlined_call_operand.hbm [shape: f32[3,128], index: 0, kind: input, shape index: {}]
  %s1 = inlined_call_operand.hbm [shape: f32[128,256], index: 1, kind: input, shape index: {}]
  %s2 = inlined_call_operand.hbm [shape: f32[3,256], index: 2, kind: output, shape index: {}]
  %s3 = sld [smem:[#allocation0]]
  $region26: #{tpu_custom_call.1} parent=0
    _
  %s5 = ssub.s32 1, %s3
  %s6 = scalar_select 0, %s5, %s3
  $region1: #{tpu_custom_call.1} parent=0
    #allocation2 [shape = 'u8[2048]{0}', space=vmem, size = 0x800, scoped, tag = 'input window, operand 0, single buffered']
    #allocation3 [shape = 's32[1]{0}', space=sflag, size = 0x4, scoped, tag = 'scoped memory for tpu_custom_call.1']
    #allocation4 [shape = 's32[1]{0}', space=sflag, size = 0x4, scoped, tag = 'scoped memory for tpu_custom_call.1']
    #allocation5 [shape = 'u8[131072]{0}', space=vmem, size = 0x20000, scoped, tag = 'input window, operand 1, single buffered']
    #allocation6 [shape = 's32[1]{0}', space=sflag, size = 0x4, scoped, tag = 'scoped memory for tpu_custom_call.1']
    #allocation7 [shape = 'u8[4096]{0}', space=vmem, size = 0x1000, scoped, tag = 'output window, operand 0, single buffered']
    %7 = vsyncpa [#allocation3], 0
    %8 = vsyncpa [#allocation6], 0
    %9 = vsyncpa [#allocation4], 0
    // Predicated region
    $region2: #{tpu_custom_call.1} parent=1 // pred_check
      _
    $region3: #{tpu_custom_call.1} parent=1 // pred_check_branch
      %11 = sbr.rel (0) target = $region5
    $region4: #{tpu_custom_call.1} parent=1 // pred_region
      %13 = vsyncadd [#allocation3], 0
      %s15 = sshll.u32 %s0, 4
      %s16 = int_to_ptr.hbm [resolvable:$true] %s15
      %s17 = sshll.u32 [#allocation2], 4
      %s18 = int_to_ptr.vmem [resolvable:$true] %s17
      %20 = dma.hbm_to_vmem [thread:$0]  %s16, 64, %s18, [#allocation3]
    $region5: #{tpu_custom_call.1} parent=1 // pred_fallthru
      _
    // Predicated region
    $region6: #{tpu_custom_call.1} parent=1 // pred_check
      _
    $region7: #{tpu_custom_call.1} parent=1 // pred_check_branch
      %22 = sbr.rel (0) target = $region9
    $region8: #{tpu_custom_call.1} parent=1 // pred_region
      %24 = vsyncadd [#allocation6], 0
      %s25 = sshll.u32 %s1, 4
      %s26 = int_to_ptr.hbm [resolvable:$true] %s25
      %s27 = sshll.u32 [#allocation5], 4
      %s28 = int_to_ptr.vmem [resolvable:$true] %s27
      %33 = dma.hbm_to_vmem [thread:$0]  %s26, 4096, %s28, [#allocation6], 256, 256, 16
    $region9: #{tpu_custom_call.1} parent=1 // pred_fallthru
      _
    // Predicated region
    $region10: #{tpu_custom_call.1} parent=1 // pred_check
      _
    $region11: #{tpu_custom_call.1} parent=1 // pred_check_branch
      %35 = sbr.rel (0) target = $region13
    $region12: #{tpu_custom_call.1} parent=1 // pred_region
      %37 = dma.done [#allocation3], 64
    $region13: #{tpu_custom_call.1} parent=1 // pred_fallthru
      _
    // Predicated region
    $region14: #{tpu_custom_call.1} parent=1 // pred_check
      _
    $region15: #{tpu_custom_call.1} parent=1 // pred_check_branch
      %39 = sbr.rel (0) target = $region17
    $region16: #{tpu_custom_call.1} parent=1 // pred_region
      %41 = dma.done [#allocation6], 4096
    $region17: #{tpu_custom_call.1} parent=1 // pred_fallthru
      _
    %v42 = vld [vmem:[#allocation2] sm:$0x7]
    %v43 = vld [vmem:[#allocation5] sm:$0xff]
    %v44 = vld [vmem:[#allocation5 + $0x8] sm:$0xff]
    %v45 = vld [vmem:[#allocation5 + $0x10] sm:$0xff]
    %v46 = vld [vmem:[#allocation5 + $0x18] sm:$0xff]
    %v47 = vld [vmem:[#allocation5 + $0x20] sm:$0xff]
    %v48 = vld [vmem:[#allocation5 + $0x28] sm:$0xff]
    %v49 = vld [vmem:[#allocation5 + $0x30] sm:$0xff]
    %v50 = vld [vmem:[#allocation5 + $0x38] sm:$0xff]
    %v51 = vld [vmem:[#allocation5 + $0x40] sm:$0xff]
    %v52 = vld [vmem:[#allocation5 + $0x48] sm:$0xff]
    %v53 = vld [vmem:[#allocation5 + $0x50] sm:$0xff]
    %v54 = vld [vmem:[#allocation5 + $0x58] sm:$0xff]
    %v55 = vld [vmem:[#allocation5 + $0x60] sm:$0xff]
    %v56 = vld [vmem:[#allocation5 + $0x68] sm:$0xff]
    %v57 = vld [vmem:[#allocation5 + $0x70] sm:$0xff]
    %v58 = vld [vmem:[#allocation5 + $0x78] sm:$0xff]
    %v59 = vld [vmem:[#allocation5 + $0x80] sm:$0xff]
    %v60 = vld [vmem:[#allocation5 + $0x88] sm:$0xff]
    %v61 = vld [vmem:[#allocation5 + $0x90] sm:$0xff]
    %v62 = vld [vmem:[#allocation5 + $0x98] sm:$0xff]
    %v63 = vld [vmem:[#allocation5 + $0xa0] sm:$0xff]
    %v64 = vld [vmem:[#allocation5 + $0xa8] sm:$0xff]
    %v65 = vld [vmem:[#allocation5 + $0xb0] sm:$0xff]
    %v66 = vld [vmem:[#allocation5 + $0xb8] sm:$0xff]
    %v67 = vld [vmem:[#allocation5 + $0xc0] sm:$0xff]
    %v68 = vld [vmem:[#allocation5 + $0xc8] sm:$0xff]
    %v69 = vld [vmem:[#allocation5 + $0xd0] sm:$0xff]
    %v70 = vld [vmem:[#allocation5 + $0xd8] sm:$0xff]
    %v71 = vld [vmem:[#allocation5 + $0xe0] sm:$0xff]
    %v72 = vld [vmem:[#allocation5 + $0xe8] sm:$0xff]
    %v73 = vld [vmem:[#allocation5 + $0xf0] sm:$0xff]
    %v74 = vld [vmem:[#allocation5 + $0xf8] sm:$0xff]
    %75 = vmatpush.msra.mxu0 %v73
    %76 = vmatpush.msra.mxu0 %v71
    %77 = vmatpush.msra.mxu0 %v69
    %78 = vmatpush.msra.mxu0 %v67
    %79 = vmatpush.msra.mxu0 %v65
    %80 = vmatpush.msra.mxu0 %v63
    %81 = vmatpush.msra.mxu0 %v61
    %82 = vmatpush.msra.mxu0 %v59
    %83 = vmatpush.msra.mxu0 %v57
    %84 = vmatpush.msra.mxu0 %v55
    %85 = vmatpush.msra.mxu0 %v53
    %86 = vmatpush.msra.mxu0 %v51
    %87 = vmatpush.msra.mxu0 %v49
    %88 = vmatpush.msra.mxu0 %v47
    %89 = vmatpush.msra.mxu0 %v45
    %90 = vmatpush.msra.mxu0 %v43
    %91 = vmatmul.f32.gmra.mxu0 %v42
    %v92 = vpop.f32.mrf.mxu0
    %v93 = vadd.f32 0.0, %v92
    %94 = vdwg.mxu0
    %95 = vmatpush.msra.mxu0 %v74
    %96 = vmatpush.msra.mxu0 %v72
    %97 = vmatpush.msra.mxu0 %v70
    %98 = vmatpush.msra.mxu0 %v68
    %99 = vmatpush.msra.mxu0 %v66
    %100 = vmatpush.msra.mxu0 %v64
    %101 = vmatpush.msra.mxu0 %v62
    %102 = vmatpush.msra.mxu0 %v60
    %103 = vmatpush.msra.mxu0 %v58
    %104 = vmatpush.msra.mxu0 %v56
    %105 = vmatpush.msra.mxu0 %v54
    %106 = vmatpush.msra.mxu0 %v52
    %107 = vmatpush.msra.mxu0 %v50
    %108 = vmatpush.msra.mxu0 %v48
    %109 = vmatpush.msra.mxu0 %v46
    %110 = vmatpush.msra.mxu0 %v44
    %111 = vmatmul.f32.gmra.mxu0 %v42
    %v112 = vpop.f32.mrf.mxu0
    %v113 = vadd.f32 0.0, %v112
    %114 = vdwg.mxu0
    %v117 = vrot.slane %v113, 4
    %vm118 = vcmask 1043456
    %v119 = vsel %vm118, %v93, %v117
    %121 = vst [vmem:[#allocation7] sm:$0x77] %v119
    // Predicated region
    $region18: #{tpu_custom_call.1} parent=1 // pred_check
      _
    $region19: #{tpu_custom_call.1} parent=1 // pred_check_branch
      %123 = sbr.rel (0) target = $region21
    $region20: #{tpu_custom_call.1} parent=1 // pred_region
      %125 = vsyncadd [#allocation4], 0
      %s127 = sshll.u32 [#allocation7], 4
      %s128 = int_to_ptr.vmem [resolvable:$true] %s127
      %s129 = sshll.u32 %s2, 4
      %s130 = int_to_ptr.hbm [resolvable:$true] %s129
      %132 = dma.vmem_to_hbm [thread:$0]  %s128, 128, %s130, [#allocation4]
    $region21: #{tpu_custom_call.1} parent=1 // pred_fallthru
      _
    // Predicated region
    $region22: #{tpu_custom_call.1} parent=1 // pred_check
      _
    $region23: #{tpu_custom_call.1} parent=1 // pred_check_branch
      %134 = sbr.rel (0) target = $region25
    $region24: #{tpu_custom_call.1} parent=1 // pred_region
      %136 = dma.done [#allocation4], 128
    $region25: #{tpu_custom_call.1} parent=1 // pred_fallthru
      _
    %137 = vsyncpa [#allocation3], 1
    %138 = vsyncpa [#allocation6], 1
    %139 = vsyncpa [#allocation4], 1

</llo_original>
